<compile_context>
chip_gen: v7x
topology: tpu7x:2x2x1
jax: 0.10.0
libtpu: 0.0.40
codegen_flags: <defaults>
</compile_context>

<pallas_src>
import functools

import jax
import jax.numpy as jnp
from jax.experimental import pallas as pl
from jax.experimental.pallas import tpu as pltpu

MARGIN = 1.0
EPS = 1e-9


def _contrastive_loss_kernel(o1_ref, o2_ref, t_ref, loss_ref, *,
                             margin, eps, batch, tile_b):
    # o1_ref, o2_ref: (TILE_B, D) native dtype in VMEM
    # t_ref:          (TILE_B, 1) labels in VMEM
    # loss_ref:       (TILE_B, 1) f32 per-example losses (masked rows -> 0)
    o1 = o1_ref[...].astype(jnp.float32)
    o2 = o2_ref[...].astype(jnp.float32)
    t = t_ref[...].astype(jnp.float32)

    diff = o2 - o1                                            # (TILE_B, D)
    distances = jnp.sum(diff * diff, axis=1, keepdims=True)   # (TILE_B, 1)
    d = jnp.sqrt(distances + eps)
    hinge = jnp.maximum(margin - d, 0.0)
    losses = 0.5 * (t * distances + (1.0 - t) * hinge * hinge)

    # Mask rows past the true batch size (partial last tile reads garbage).
    row = (pl.program_id(0) * tile_b
           + jax.lax.broadcasted_iota(jnp.int32, losses.shape, 0))
    loss_ref[...] = jnp.where(row < batch, losses, 0.0)


def _pick_tile_b(B, D, itemsize):
    # Aim for ~2 MiB per input block: 2 inputs x 2 pipeline buffers ~= 8 MiB
    # of VMEM, well under the scoped limit on every TPU generation.
    target_bytes = 2 * 1024 * 1024
    tb = target_bytes // max(1, D * itemsize)
    tb = max(8, (tb // 8) * 8)   # multiple of the 8-sublane tile
    tb = min(tb, 1024)
    if B <= tb:
        return B                 # single block == full array dims (always legal)
    return tb


def contrastive_loss(output1, output2, target, margin=MARGIN,
                     size_average=True, tile_b=None):
    B, D = output1.shape
    t = target.reshape(B, 1)

    if tile_b is None:
        tile_b = _pick_tile_b(B, D, output1.dtype.itemsize)
    num_tiles = pl.cdiv(B, tile_b)

    kernel = functools.partial(
        _contrastive_loss_kernel,
        margin=float(margin), eps=EPS, batch=B, tile_b=tile_b)

    per_row = pl.pallas_call(
        kernel,
        out_shape=jax.ShapeDtypeStruct((num_tiles * tile_b, 1), jnp.float32),
        grid_spec=pl.GridSpec(
            grid=(num_tiles,),
            in_specs=[
                pl.BlockSpec((tile_b, D), lambda i: (i, 0)),
                pl.BlockSpec((tile_b, D), lambda i: (i, 0)),
                pl.BlockSpec((tile_b, 1), lambda i: (i, 0)),
            ],
            out_specs=pl.BlockSpec((tile_b, 1), lambda i: (i, 0)),
        ),
        compiler_params=pltpu.CompilerParams(
            dimension_semantics=("parallel",),
            vmem_limit_bytes=32 * 1024 * 1024,
        ),
    )(output1, output2, t)

    loss_sum = jnp.sum(per_row)          # masked pad rows contribute 0
    if size_average:
        return loss_sum / jnp.float32(B)
    return loss_sum


def _reference(output1, output2, target, margin, size_average):
    distances = jnp.sum((output2.astype(jnp.float32)
                         - output1.astype(jnp.float32)) ** 2, axis=1)
    d = jnp.sqrt(distances + EPS)
    losses = 0.5 * (target.astype(jnp.float32) * distances
                    + (1.0 - target.astype(jnp.float32))
                    * jnp.maximum(margin - d, 0.0) ** 2)
    return jnp.mean(losses) if size_average else jnp.sum(losses)


if __name__ == "__main__":
    key = jax.random.PRNGKey(0)
    k1, k2, k3, k4, k5, k6 = jax.random.split(key, 6)

    # Test 1: small batch, f32, mean reduction (single tile).
    B, D = 8, 32
    output1 = jax.random.normal(k1, (B, D), dtype=jnp.float32)
    output2 = jax.random.normal(k2, (B, D), dtype=jnp.float32)
    target = jax.random.bernoulli(k3, 0.5, (B,)).astype(jnp.int32)

    loss = contrastive_loss(output1, output2, target, margin=MARGIN,
                            size_average=True)
    loss = jax.block_until_ready(loss)
    ref = _reference(output1, output2, target, MARGIN, True)
    assert jnp.allclose(loss, ref, rtol=1e-5, atol=1e-6), (loss, ref)

    # Test 2: batch not a multiple of the tile, forced small tile to exercise
    # the multi-tile path + partial-block masking, sum reduction.
    B2, D2 = 20, 32
    o1b = jax.random.normal(k4, (B2, D2), dtype=jnp.float32)
    o2b = jax.random.normal(k5, (B2, D2), dtype=jnp.float32)
    tb = jax.random.bernoulli(k6, 0.5, (B2,)).astype(jnp.int32)

    loss2 = contrastive_loss(o1b, o2b, tb, margin=MARGIN,
                             size_average=False, tile_b=8)
    loss2 = jax.block_until_ready(loss2)
    ref2 = _reference(o1b, o2b, tb, MARGIN, False)
    assert jnp.allclose(loss2, ref2, rtol=1e-5, atol=1e-5), (loss2, ref2)

    print("KERNEL_OK")
</pallas_src>

<mosaic_0001>
module attributes {stable_mosaic.version = 11 : i64} {
  func.func @_contrastive_loss_kernel(%arg0: i32, %arg1: memref<8x32xf32, #tpu.memory_space<vmem>>, %arg2: memref<8x32xf32, #tpu.memory_space<vmem>>, %arg3: memref<8x1xi32, #tpu.memory_space<vmem>>, %arg4: memref<8x1xf32, #tpu.memory_space<vmem>>) attributes {dimension_semantics = [#tpu.dimension_semantics<parallel>], iteration_bounds = array<i64: 1>, scalar_prefetch = 0 : i64, scratch_operands = 0 : i64, tpu.core_type = #tpu.core_type<tc>, window_params = [{transform_indices = @transform_0, window_bounds = array<i64: 8, 32>}, {transform_indices = @transform_1, window_bounds = array<i64: 8, 32>}, {transform_indices = @transform_2, window_bounds = array<i64: 8, 1>}, {transform_indices = @transform_3, window_bounds = array<i64: 8, 1>}]} {
    %c0 = arith.constant 0 : index
    %c0_0 = arith.constant 0 : index
    %0 = vector.load %arg1[%c0, %c0_0] : memref<8x32xf32, #tpu.memory_space<vmem>>, vector<8x32xf32>
    %c0_1 = arith.constant 0 : index
    %c0_2 = arith.constant 0 : index
    %1 = vector.load %arg2[%c0_1, %c0_2] : memref<8x32xf32, #tpu.memory_space<vmem>>, vector<8x32xf32>
    %c0_3 = arith.constant 0 : index
    %c0_4 = arith.constant 0 : index
    %2 = vector.load %arg3[%c0_3, %c0_4] : memref<8x1xi32, #tpu.memory_space<vmem>>, vector<8x1xi32>
    %3 = arith.sitofp %2 : vector<8x1xi32> to vector<8x1xf32>
    %4 = arith.subf %1, %0 : vector<8x32xf32>
    %5 = arith.mulf %4, %4 : vector<8x32xf32>
    %cst = arith.constant dense<0.000000e+00> : vector<8xf32>
    %6 = vector.multi_reduction <add>, %5, %cst [1] : vector<8x32xf32> to vector<8xf32>
    %7 = vector.shape_cast %6 : vector<8xf32> to vector<8x1xf32>
    %cst_5 = arith.constant 9.99999971E-10 : f32
    %8 = vector.broadcast %cst_5 : f32 to vector<8x1xf32>
    %9 = arith.addf %7, %8 : vector<8x1xf32>
    %10 = math.sqrt %9 : vector<8x1xf32>
    %cst_6 = arith.constant 1.000000e+00 : f32
    %11 = vector.broadcast %cst_6 : f32 to vector<8x1xf32>
    %12 = arith.subf %11, %10 : vector<8x1xf32>
    %cst_7 = arith.constant 0.000000e+00 : f32
    %13 = vector.broadcast %cst_7 : f32 to vector<8x1xf32>
    %14 = arith.maximumf %12, %13 : vector<8x1xf32>
    %15 = arith.mulf %3, %7 : vector<8x1xf32>
    %cst_8 = arith.constant 1.000000e+00 : f32
    %16 = vector.broadcast %cst_8 : f32 to vector<8x1xf32>
    %17 = arith.subf %16, %3 : vector<8x1xf32>
    %18 = arith.mulf %17, %14 : vector<8x1xf32>
    %19 = arith.mulf %18, %14 : vector<8x1xf32>
    %20 = arith.addf %15, %19 : vector<8x1xf32>
    %cst_9 = arith.constant 5.000000e-01 : f32
    %21 = vector.broadcast %cst_9 : f32 to vector<8x1xf32>
    %22 = arith.mulf %21, %20 : vector<8x1xf32>
    %c8_i32 = arith.constant 8 : i32
    %23 = arith.muli %arg0, %c8_i32 : i32
    %24 = tpu.iota {dimensions = array<i32: 0>} : vector<8x1xi32>
    %25 = vector.broadcast %23 : i32 to vector<8x1xi32>
    %26 = arith.addi %25, %24 : vector<8x1xi32>
    %c8_i32_10 = arith.constant 8 : i32
    %27 = vector.broadcast %c8_i32_10 : i32 to vector<8x1xi32>
    %28 = arith.cmpi slt, %26, %27 : vector<8x1xi32>
    %cst_11 = arith.constant 0.000000e+00 : f32
    %29 = vector.broadcast %cst_11 : f32 to vector<8x1xf32>
    %30 = arith.select %28, %22, %29 : vector<8x1xi1>, vector<8x1xf32>
    %c0_12 = arith.constant 0 : index
    %c0_13 = arith.constant 0 : index
    %31 = vector.load %arg4[%c0_12, %c0_13] : memref<8x1xf32, #tpu.memory_space<vmem>>, vector<8x1xf32>
    tpu.vector_store %arg4[%c0_12, %c0_13], %30 {strides = array<i32>} : memref<8x1xf32, #tpu.memory_space<vmem>>, vector<8x1xf32>,
    return
  }
  func.func @transform_0(%arg0: i32) -> (i32, i32) {
    %c0_i32 = arith.constant 0 : i32
    %c0_i32_0 = arith.constant 0 : i32
    return %arg0, %c0_i32 : i32, i32
  }
  func.func @transform_1(%arg0: i32) -> (i32, i32) {
    %c0_i32 = arith.constant 0 : i32
    %c0_i32_0 = arith.constant 0 : i32
    return %arg0, %c0_i32 : i32, i32
  }
  func.func @transform_2(%arg0: i32) -> (i32, i32) {
    %c0_i32 = arith.constant 0 : i32
    %c0_i32_0 = arith.constant 0 : i32
    return %arg0, %c0_i32 : i32, i32
  }
  func.func @transform_3(%arg0: i32) -> (i32, i32) {
    %c0_i32 = arith.constant 0 : i32
    %c0_i32_0 = arith.constant 0 : i32
    return %arg0, %c0_i32 : i32, i32
  }
}

</mosaic_0001>

<llo_original>
// kernel: tpu_custom_call.1
$region0: #{tpu_custom_call.1}
  #allocation0 [shape = 'u32[]', space=smem, size = 0x4, offset = 0x4, fixed_abs, tag = 'smem constant byte address 0x4 - core index']
  #allocation1 [shape = 'u32[144,128]{1,0:T(1,128)}', space=vmem, size = 0x12000, scoped, tag = 'internal scratch']
  %s0 = inlined_call_operand.vmem [shape: f32[8,32], index: 0, kind: input, shape index: {}]
  %s1 = inlined_call_operand.hbm [shape: f32[8,32], index: 1, kind: input, shape index: {}]
  %s2 = inlined_call_operand.vmem [shape: s32[8,1], index: 2, kind: input, shape index: {}]
  %s3 = inlined_call_operand.vmem [shape: f32[8,1], index: 3, kind: output, shape index: {}]
  %s4 = sld [smem:[#allocation0]]
  $region26: #{tpu_custom_call.1} parent=0
    _
  %s6 = ssub.s32 1, %s4
  %s7 = scalar_select 0, %s6, %s4
  $region1: #{tpu_custom_call.1} parent=0
    #allocation2 [shape = 'u8[4096]{0}', space=vmem, size = 0x1000, scoped, tag = 'input window, operand 1, single buffered']
    #allocation3 [shape = 's32[1]{0}', space=sflag, size = 0x4, scoped, tag = 'scoped memory for tpu_custom_call.1']
    %8 = vsyncpa [#allocation3], 0
    // Predicated region
    $region2: #{tpu_custom_call.1} parent=1 // pred_check
      _
    $region3: #{tpu_custom_call.1} parent=1 // pred_check_branch
      %10 = sbr.rel (0) target = $region5
    $region4: #{tpu_custom_call.1} parent=1 // pred_region
      _
    $region5: #{tpu_custom_call.1} parent=1 // pred_fallthru
      _
    // Predicated region
    $region6: #{tpu_custom_call.1} parent=1 // pred_check
      _
    $region7: #{tpu_custom_call.1} parent=1 // pred_check_branch
      %12 = sbr.rel (0) target = $region9
    $region8: #{tpu_custom_call.1} parent=1 // pred_region
      %s14 = ssub.s32 128, 128
      %15 = vsyncadd [#allocation3], %s14
      %s17 = sshll.u32 [#allocation2], 4
      %s18 = int_to_ptr.vmem [resolvable:$true] %s17
      %20 = dma.hbm_to_vmem [thread:$0]  %s1, 128, %s18, [#allocation3]
    $region9: #{tpu_custom_call.1} parent=1 // pred_fallthru
      _
    // Predicated region
    $region10: #{tpu_custom_call.1} parent=1 // pred_check
      _
    $region11: #{tpu_custom_call.1} parent=1 // pred_check_branch
      %22 = sbr.rel (0) target = $region13
    $region12: #{tpu_custom_call.1} parent=1 // pred_region
      _
    $region13: #{tpu_custom_call.1} parent=1 // pred_fallthru
      _
    // Predicated region
    $region14: #{tpu_custom_call.1} parent=1 // pred_check
      _
    $region15: #{tpu_custom_call.1} parent=1 // pred_check_branch
      %24 = sbr.rel (0) target = $region17
    $region16: #{tpu_custom_call.1} parent=1 // pred_region
      %25 = dma.done [#allocation3], 128
    $region17: #{tpu_custom_call.1} parent=1 // pred_fallthru
      _
    %v26 = vld [vmem:[%s0] sm:$0xff]
    %v27 = vld [vmem:[#allocation2] sm:$0xff]
    %v28 = vld [vmem:[%s2] sm:$0xff]
    %v29 = vcvt.s32.f32 %v28
    %v30 = vsub.f32 %v27, %v26
    %v31 = vmul.f32 %v30, %v30
    %vm32 = vcmask 261120
    %v33 = vsel %vm32, %v31, 0.0
    %34 = vadd.xlane.f32.xlu0 %v33
    %v35 = vpop.xlane.xlu0 %34
    %v36 = vadd.f32 %v35, 1e-09
    %v37 = vrsqrt.pop %v36
    %v38 = vmul.f32 %v36, %v37
    %vm39 = vcmp.eq.f32.partialorder %v36, inf
    %v40 = vsel %vm39, %v36, %v38
    %vm41 = vcmp.eq.f32.partialorder %v36, 0.0
    %v42 = vand.u32 %v36, 2147483648
    %v43 = vsel %vm41, %v42, %v40
    %v44 = vsub.f32 1.0, %v43
    %v45 = vmax.f32 %v44, 0.0
    %v46 = vmul.f32 %v29, %v35
    %v47 = vsub.f32 1.0, %v29
    %v48 = vmul.f32 %v47, %v45
    %v49 = vmul.f32 %v48, %v45
    %v50 = vadd.f32 %v46, %v49
    %v51 = vmul.f32 %v50, 0.5
    %s52 = smul.u32 0, 8
    %v53 = vlaneseq
    %v54 = vshrl.u32 %v53, 7
    %v55 = vstv %s52
    %v56 = vadd.s32 %v55, %v54
    %vm57 = vcmp.lt.s32.totalorder %v56, 8
    %v58 = vsel %vm57, %v51, 0.0
    %vm59 = vcmask 7168
    %60 = vst.msk [vmem:[%s3] sm:$0xff] %vm59, %v58
    // Predicated region
    $region18: #{tpu_custom_call.1} parent=1 // pred_check
      _
    $region19: #{tpu_custom_call.1} parent=1 // pred_check_branch
      %62 = sbr.rel (0) target = $region21
    $region20: #{tpu_custom_call.1} parent=1 // pred_region
      _
    $region21: #{tpu_custom_call.1} parent=1 // pred_fallthru
      _
    // Predicated region
    $region22: #{tpu_custom_call.1} parent=1 // pred_check
      _
    $region23: #{tpu_custom_call.1} parent=1 // pred_check_branch
      %64 = sbr.rel (0) target = $region25
    $region24: #{tpu_custom_call.1} parent=1 // pred_region
      _
    $region25: #{tpu_custom_call.1} parent=1 // pred_fallthru
      _
    %65 = vsyncpa [#allocation3], 1

</llo_original>
